<compile_context>
chip_gen: v6e
topology: v6e:2x2x1
jax: 0.10.0
libtpu: 0.0.40
codegen_flags: <defaults>
</compile_context>

<pallas_src>
import functools

import jax
import jax.numpy as jnp
import numpy as np
from jax import lax
from jax.experimental import pallas as pl
from jax.experimental.pallas import tpu as pltpu


# ----------------------------------------------------------------------------
# Kernel 1: per-edge TransE score   gamma - || h + r - t ||_p   (reduce last dim)
# ----------------------------------------------------------------------------
def _edge_score_kernel(h_ref, r_ref, t_ref, o_ref, *, gamma, dist_ord):
    d = h_ref[...] + r_ref[...] - t_ref[...]              # (TE, D)
    if dist_ord == 1:
        nrm = jnp.sum(jnp.abs(d), axis=-1, keepdims=True)
    else:
        nrm = jnp.sqrt(jnp.sum(d * d, axis=-1, keepdims=True))
    o_ref[...] = (gamma - nrm).astype(o_ref.dtype)         # (TE, 1)


def transe_edge_score(head, rel, tail, gamma, dist_ord=2, block_rows=2048):
    """head, rel, tail: (E, D) float32 -> (E,) float32."""
    E, D = head.shape

    # Size the row tile so the double-buffered working set
    # (2 buffers x [3 inputs x TE x D + TE] x 4B) stays ~20 MiB; the explicit
    # 32 MiB vmem limit below then has headroom on every generation
    # (v5e's scoped-VMEM *default* is only 16 MiB, so do not rely on it).
    vmem_budget = 20 * 1024 * 1024
    max_rows = max(8, vmem_budget // (2 * 4 * (3 * D + 1)))
    TE = min(block_rows, E, max_rows)
    if TE < E:
        TE = max(8, (TE // 8) * 8)        # partial blocks need sublane alignment
    # else TE == E: full first dim is always a legal block shape.

    out = pl.pallas_call(
        functools.partial(_edge_score_kernel, gamma=float(gamma), dist_ord=dist_ord),
        out_shape=jax.ShapeDtypeStruct((E, 1), head.dtype),
        grid=(pl.cdiv(E, TE),),            # ragged tail block is masked by Pallas
        in_specs=[pl.BlockSpec((TE, D), lambda i: (i, 0)) for _ in range(3)],
        out_specs=pl.BlockSpec((TE, 1), lambda i: (i, 0)),
        compiler_params=pltpu.CompilerParams(
            dimension_semantics=("parallel",),
            vmem_limit_bytes=32 * 1024 * 1024),
    )(head, rel, tail)
    # Output bytes are ~1/D of input bytes, so the 1-lane masked stores of the
    # (TE, 1) output are not the bottleneck on this HBM-bound kernel.
    return out[:, 0]


# ----------------------------------------------------------------------------
# Kernel 2: negative-sampling score (l2), tiled (chunk, M-tile, N-tile).
#   a = x (+/-) r            (TM, D)   x = heads (neg_head=False) or tails (True)
#   b = y                    (TN, D)   y = tails (neg_head=False) or heads (True)
#   score = gamma - sqrt( clamp_min( ||a||^2 + ||b||^2 - 2 a.b^T , 1e-30 ) )
# ----------------------------------------------------------------------------
def _neg_l2_kernel(x_ref, r_ref, y_ref, o_ref, *, gamma, rel_sign, use_bf16_matmul):
    if rel_sign >= 0:
        a = x_ref[...] + r_ref[...]                        # (TM, D)
    else:
        a = x_ref[...] - r_ref[...]                        # (TM, D)
    b = y_ref[...]                                         # (TN, D)
    # Norms are always f32 (only the -2ab term is affected by the bf16 option).
    a_sq = jnp.sum(a * a, axis=-1, keepdims=True)          # (TM, 1)
    b_sq = jnp.sum(b * b, axis=-1, keepdims=True)          # (TN, 1)
    if use_bf16_matmul:
        # Opt-in: bf16 operands with f32 accumulation. The MXU is bf16-native
        # (f32xf32 is multi-pass emulation on v5e/v7x); adds ~1e-3 rel error.
        a_mm = a.astype(jnp.bfloat16)
        b_mm = b.astype(jnp.bfloat16)
    else:
        a_mm, b_mm = a, b
    # Contract both operands on their last (lane) dim -> feeds MXU directly,
    # no XLU transpose of the (TN, D) tile.
    ab = lax.dot_general(a_mm, b_mm, dimension_numbers=(((1,), (1,)), ((), ())),
                         preferred_element_type=jnp.float32)   # (TM, TN)
    # baddbmm(b_sq[None,:], a, b^T, alpha=-2).add_(a_sq[:,None])
    sq = (b_sq.T + a_sq) - 2.0 * ab
    sq = jnp.maximum(sq, 1e-30)                            # clamp_min_
    o_ref[...] = (gamma - jnp.sqrt(sq)).astype(o_ref.dtype)
    # TODO(synk): a / a_sq are recomputed per N tile; staging them in VMEM
    #             scratch behind @pl.when(n == 0) would need the N axis to be
    #             "arbitrary", conflicting with the v7x megacore "parallel"
    #             sharding of N. Recompute cost is <1% of the MXU work.


def _select_neg_tiles(cs, ns, D, tile_m, tile_n, vmem_budget=24 * 1024 * 1024):
    """Pick (TM, TN). Full dims when small; otherwise 128-aligned tiles with a
    cdiv grid (ragged tails masked). The double-buffered working set is capped
    (shrinking TN before TM) so it also fits v7x's smaller VMEM."""
    if cs <= tile_m:
        TM = cs                                           # full dim: always legal
    else:
        align_m = 128 if tile_m >= 128 else 8             # MXU-friendly M tiles
        TM = max(align_m, (tile_m // align_m) * align_m)
    if ns <= tile_n:
        TN = ns
    else:
        TN = max(128, (tile_n // 128) * 128)              # lane-dense output tile

    def ws_bytes(tm, tn):
        # 2 pipeline buffers x [x + r tiles (tm,D) + y tile (tn,D) + out (tm,tn)] f32
        return 2 * (2 * tm * D + tn * D + tm * tn) * 4

    while ws_bytes(TM, TN) > vmem_budget and TN > 128:
        TN = max(128, ((TN // 2) // 128) * 128)
    while ws_bytes(TM, TN) > vmem_budget and TM > 8:
        TM = max(8, ((TM // 2) // 8) * 8)
    return TM, TN


def transe_neg_score_l2(heads, relations, tails, num_chunks, chunk_size,
                        neg_sample_size, gamma, neg_head=False,
                        tile_m=1024, tile_n=2048, use_bf16_matmul=False):
    """neg_head=False: heads/relations (nc*cs, D), tails (nc*ns, D).
       neg_head=True : tails/relations (nc*cs, D), heads (nc*ns, D).
       Returns (num_chunks, chunk_size, neg_sample_size) float32."""
    D = heads.shape[1]
    if neg_head:
        x = tails.reshape(num_chunks, chunk_size, D)
        r = relations.reshape(num_chunks, chunk_size, D)
        y = heads.reshape(num_chunks, neg_sample_size, D)
        rel_sign = -1
    else:
        x = heads.reshape(num_chunks, chunk_size, D)
        r = relations.reshape(num_chunks, chunk_size, D)
        y = tails.reshape(num_chunks, neg_sample_size, D)
        rel_sign = 1

    TM, TN = _select_neg_tiles(chunk_size, neg_sample_size, D, tile_m, tile_n)
    grid = (num_chunks, pl.cdiv(chunk_size, TM), pl.cdiv(neg_sample_size, TN))

    return pl.pallas_call(
        functools.partial(_neg_l2_kernel, gamma=float(gamma), rel_sign=rel_sign,
                          use_bf16_matmul=use_bf16_matmul),
        out_shape=jax.ShapeDtypeStruct((num_chunks, chunk_size, neg_sample_size),
                                       jnp.float32),
        grid=grid,
        in_specs=[
            # N-tile axis is innermost and the x/r block index is constant
            # across it, so the a-side tiles are DMA'd once per (c, m).
            pl.BlockSpec((pl.Squeezed(), TM, D), lambda c, m, n: (c, m, 0)),
            pl.BlockSpec((pl.Squeezed(), TM, D), lambda c, m, n: (c, m, 0)),
            pl.BlockSpec((pl.Squeezed(), TN, D), lambda c, m, n: (c, n, 0)),
        ],
        out_specs=pl.BlockSpec((pl.Squeezed(), TM, TN), lambda c, m, n: (c, m, n)),
        # All three grid axes index independent output blocks -> all "parallel"
        # so v7x's two TensorCores can shard the (usually largest) N axis too.
        compiler_params=pltpu.CompilerParams(
            dimension_semantics=("parallel", "parallel", "parallel"),
            vmem_limit_bytes=32 * 1024 * 1024),
    )(x, r, y)


# TODO(synk): l1 variant of create_neg (th.cdist p=1) and the infer() 3-way
#             broadcast scorer are not implemented as kernels; only the default
#             l2 negative path and edge_func are kernelized.


# ----------------------------------------------------------------------------
# Pure-JAX references (mirror the PyTorch code exactly)
# ----------------------------------------------------------------------------
def _ref_edge_score(h, r, t, gamma, dist_ord=2):
    d = h + r - t
    if dist_ord == 1:
        n = jnp.sum(jnp.abs(d), axis=-1)
    else:
        n = jnp.sqrt(jnp.sum(d * d, axis=-1))
    return gamma - n


def _ref_neg_score_l2(heads, relations, tails, nc, cs, ns, gamma, neg_head=False):
    D = heads.shape[1]
    if neg_head:
        a = (tails - relations).reshape(nc, cs, D)
        b = heads.reshape(nc, ns, D)
    else:
        a = (heads + relations).reshape(nc, cs, D)
        b = tails.reshape(nc, ns, D)
    a_sq = jnp.sum(a * a, axis=-1)
    b_sq = jnp.sum(b * b, axis=-1)
    sq = b_sq[:, None, :] - 2.0 * jnp.einsum("bik,bjk->bij", a, b) + a_sq[:, :, None]
    return gamma - jnp.sqrt(jnp.maximum(sq, 1e-30))


if __name__ == "__main__":
    gamma = 12.0
    key = jax.random.PRNGKey(0)
    keys = jax.random.split(key, 16)

    # --- edge_func path, small shapes (E=8, D=32), p in {1, 2} ---
    E, hidden = 8, 32
    head = jax.random.normal(keys[0], (E, hidden), dtype=jnp.float32)
    rel = jax.random.normal(keys[1], (E, hidden), dtype=jnp.float32)
    tail = jax.random.normal(keys[2], (E, hidden), dtype=jnp.float32)
    for p in (1, 2):
        got = jax.block_until_ready(transe_edge_score(head, rel, tail, gamma, p))
        np.testing.assert_allclose(np.asarray(got),
                                   np.asarray(_ref_edge_score(head, rel, tail, gamma, p)),
                                   rtol=1e-5, atol=1e-5)

    # --- edge_func path, row tiling with a masked ragged tail (E=600, TE=256) ---
    E2, D2 = 600, 128
    h2 = jax.random.normal(keys[3], (E2, D2), dtype=jnp.float32)
    r2 = jax.random.normal(keys[4], (E2, D2), dtype=jnp.float32)
    t2 = jax.random.normal(keys[5], (E2, D2), dtype=jnp.float32)
    got2 = jax.block_until_ready(transe_edge_score(h2, r2, t2, gamma, 2, block_rows=256))
    np.testing.assert_allclose(np.asarray(got2),
                               np.asarray(_ref_edge_score(h2, r2, t2, gamma, 2)),
                               rtol=1e-4, atol=1e-4)

    # --- create_neg (neg_head=False, l2), small shapes (2, 8, 16, D=32) ---
    nc, cs, ns = 2, 8, 16
    heads = jax.random.normal(keys[6], (nc * cs, hidden), dtype=jnp.float32)
    rels = jax.random.normal(keys[7], (nc * cs, hidden), dtype=jnp.float32)
    tails = jax.random.normal(keys[8], (nc * ns, hidden), dtype=jnp.float32)
    neg = jax.block_until_ready(
        transe_neg_score_l2(heads, rels, tails, nc, cs, ns, gamma))
    np.testing.assert_allclose(
        np.asarray(neg),
        np.asarray(_ref_neg_score_l2(heads, rels, tails, nc, cs, ns, gamma)),
        rtol=1e-4, atol=1e-4)

    # --- create_neg (neg_head=True, l2), small shapes (2, 8, 16, D=32) ---
    heads_nh = jax.random.normal(keys[9], (nc * ns, hidden), dtype=jnp.float32)
    rels_nh = jax.random.normal(keys[10], (nc * cs, hidden), dtype=jnp.float32)
    tails_nh = jax.random.normal(keys[11], (nc * cs, hidden), dtype=jnp.float32)
    neg_nh = jax.block_until_ready(
        transe_neg_score_l2(heads_nh, rels_nh, tails_nh, nc, cs, ns, gamma,
                            neg_head=True))
    np.testing.assert_allclose(
        np.asarray(neg_nh),
        np.asarray(_ref_neg_score_l2(heads_nh, rels_nh, tails_nh, nc, cs, ns, gamma,
                                     neg_head=True)),
        rtol=1e-4, atol=1e-4)

    # --- create_neg, forced M/N tiling with masked ragged tails (2, 24, 600, 128) ---
    nc2, cs2, ns2 = 2, 24, 600
    heads2 = jax.random.normal(keys[12], (nc2 * cs2, D2), dtype=jnp.float32)
    rels2 = jax.random.normal(keys[13], (nc2 * cs2, D2), dtype=jnp.float32)
    tails2 = jax.random.normal(keys[14], (nc2 * ns2, D2), dtype=jnp.float32)
    neg2 = jax.block_until_ready(
        transe_neg_score_l2(heads2, rels2, tails2, nc2, cs2, ns2, gamma,
                            tile_m=16, tile_n=256))
    ref2 = _ref_neg_score_l2(heads2, rels2, tails2, nc2, cs2, ns2, gamma)
    np.testing.assert_allclose(np.asarray(neg2), np.asarray(ref2),
                               rtol=1e-4, atol=1e-4)

    # --- create_neg, opt-in bf16 matmul operands (looser tolerance) ---
    neg2_bf16 = jax.block_until_ready(
        transe_neg_score_l2(heads2, rels2, tails2, nc2, cs2, ns2, gamma,
                            tile_m=16, tile_n=256, use_bf16_matmul=True))
    np.testing.assert_allclose(np.asarray(neg2_bf16), np.asarray(ref2),
                               rtol=5e-2, atol=2e-1)

    print("KERNEL_OK")
</pallas_src>

<mosaic_0001>
module attributes {stable_mosaic.version = 11 : i64} {
  func.func @_edge_score_kernel(%arg0: i32, %arg1: memref<8x32xf32, #tpu.memory_space<vmem>>, %arg2: memref<8x32xf32, #tpu.memory_space<vmem>>, %arg3: memref<8x32xf32, #tpu.memory_space<vmem>>, %arg4: memref<8x1xf32, #tpu.memory_space<vmem>>) attributes {dimension_semantics = [#tpu.dimension_semantics<parallel>], iteration_bounds = array<i64: 1>, scalar_prefetch = 0 : i64, scratch_operands = 0 : i64, tpu.core_type = #tpu.core_type<tc>, window_params = [{transform_indices = @transform_0, window_bounds = array<i64: 8, 32>}, {transform_indices = @transform_1, window_bounds = array<i64: 8, 32>}, {transform_indices = @transform_2, window_bounds = array<i64: 8, 32>}, {transform_indices = @transform_3, window_bounds = array<i64: 8, 1>}]} {
    %c0 = arith.constant 0 : index
    %c0_0 = arith.constant 0 : index
    %0 = vector.load %arg1[%c0, %c0_0] : memref<8x32xf32, #tpu.memory_space<vmem>>, vector<8x32xf32>
    %c0_1 = arith.constant 0 : index
    %c0_2 = arith.constant 0 : index
    %1 = vector.load %arg2[%c0_1, %c0_2] : memref<8x32xf32, #tpu.memory_space<vmem>>, vector<8x32xf32>
    %2 = arith.addf %0, %1 : vector<8x32xf32>
    %c0_3 = arith.constant 0 : index
    %c0_4 = arith.constant 0 : index
    %3 = vector.load %arg3[%c0_3, %c0_4] : memref<8x32xf32, #tpu.memory_space<vmem>>, vector<8x32xf32>
    %4 = arith.subf %2, %3 : vector<8x32xf32>
    %5 = math.absf %4 : vector<8x32xf32>
    %cst = arith.constant dense<0.000000e+00> : vector<8xf32>
    %6 = vector.multi_reduction <add>, %5, %cst [1] : vector<8x32xf32> to vector<8xf32>
    %7 = vector.shape_cast %6 : vector<8xf32> to vector<8x1xf32>
    %cst_5 = arith.constant 1.200000e+01 : f32
    %8 = vector.broadcast %cst_5 : f32 to vector<8x1xf32>
    %9 = arith.subf %8, %7 : vector<8x1xf32>
    %c0_6 = arith.constant 0 : index
    %c0_7 = arith.constant 0 : index
    %10 = vector.load %arg4[%c0_6, %c0_7] : memref<8x1xf32, #tpu.memory_space<vmem>>, vector<8x1xf32>
    tpu.vector_store %arg4[%c0_6, %c0_7], %9 {strides = array<i32>} : memref<8x1xf32, #tpu.memory_space<vmem>>, vector<8x1xf32>,
    return
  }
  func.func @transform_0(%arg0: i32) -> (i32, i32) {
    %c0_i32 = arith.constant 0 : i32
    %c0_i32_0 = arith.constant 0 : i32
    return %arg0, %c0_i32 : i32, i32
  }
  func.func @transform_1(%arg0: i32) -> (i32, i32) {
    %c0_i32 = arith.constant 0 : i32
    %c0_i32_0 = arith.constant 0 : i32
    return %arg0, %c0_i32 : i32, i32
  }
  func.func @transform_2(%arg0: i32) -> (i32, i32) {
    %c0_i32 = arith.constant 0 : i32
    %c0_i32_0 = arith.constant 0 : i32
    return %arg0, %c0_i32 : i32, i32
  }
  func.func @transform_3(%arg0: i32) -> (i32, i32) {
    %c0_i32 = arith.constant 0 : i32
    %c0_i32_0 = arith.constant 0 : i32
    return %arg0, %c0_i32 : i32, i32
  }
}

</mosaic_0001>

<llo_original>
// kernel: tpu_custom_call.1
$region0: #{tpu_custom_call.1}
  #allocation0 [shape = 'u32[]', space=smem, size = 0x4, offset = 0x4, fixed_abs, tag = 'smem constant byte address 0x4 - core index']
  #allocation1 [shape = 'u32[144,128]{1,0:T(1,128)}', space=vmem, size = 0x12000, scoped, tag = 'internal scratch']
  %s0 = inlined_call_operand.hbm [shape: f32[8,32], index: 0, kind: input, shape index: {}]
  %s1 = inlined_call_operand.hbm [shape: f32[8,32], index: 1, kind: input, shape index: {}]
  %s2 = inlined_call_operand.hbm [shape: f32[8,32], index: 2, kind: input, shape index: {}]
  %s3 = inlined_call_operand.vmem [shape: f32[8,1], index: 3, kind: output, shape index: {}]
  %s4 = sld [smem:[#allocation0]]
  $region34: #{tpu_custom_call.1} parent=0
    _
  %s6 = ssub.s32 1, %s4
  %s7 = scalar_select 0, %s6, %s4
  $region1: #{tpu_custom_call.1} parent=0
    #allocation2 [shape = 'u8[4096]{0}', space=vmem, size = 0x1000, scoped, tag = 'input window, operand 0, single buffered']
    #allocation3 [shape = 's32[1]{0}', space=sflag, size = 0x4, scoped, tag = 'scoped memory for tpu_custom_call.1']
    #allocation4 [shape = 'u8[4096]{0}', space=vmem, size = 0x1000, scoped, tag = 'input window, operand 1, single buffered']
    #allocation5 [shape = 's32[1]{0}', space=sflag, size = 0x4, scoped, tag = 'scoped memory for tpu_custom_call.1']
    #allocation6 [shape = 'u8[4096]{0}', space=vmem, size = 0x1000, scoped, tag = 'input window, operand 2, single buffered']
    %8 = vsyncpa [#allocation3], 0
    %9 = vsyncpa [#allocation5], 0
    // Predicated region
    $region2: #{tpu_custom_call.1} parent=1 // pred_check
      _
    $region3: #{tpu_custom_call.1} parent=1 // pred_check_branch
      %11 = sbr.rel (0) target = $region5
    $region4: #{tpu_custom_call.1} parent=1 // pred_region
      %s13 = ssub.s32 128, 128
      %14 = vsyncadd [#allocation3], %s13
      %s16 = sshll.u32 [#allocation2], 4
      %s17 = int_to_ptr.vmem [resolvable:$true] %s16
      %19 = dma.hbm_to_vmem [thread:$0]  %s0, 128, %s17, [#allocation3]
    $region5: #{tpu_custom_call.1} parent=1 // pred_fallthru
      _
    // Predicated region
    $region6: #{tpu_custom_call.1} parent=1 // pred_check
      _
    $region7: #{tpu_custom_call.1} parent=1 // pred_check_branch
      %21 = sbr.rel (0) target = $region9
    $region8: #{tpu_custom_call.1} parent=1 // pred_region
      %s23 = ssub.s32 128, 128
      %24 = vsyncadd [#allocation5], %s23
      %s26 = sshll.u32 [#allocation4], 4
      %s27 = int_to_ptr.vmem [resolvable:$true] %s26
      %29 = dma.hbm_to_vmem [thread:$0]  %s1, 128, %s27, [#allocation5]
    $region9: #{tpu_custom_call.1} parent=1 // pred_fallthru
      _
    // Predicated region
    $region10: #{tpu_custom_call.1} parent=1 // pred_check
      _
    $region11: #{tpu_custom_call.1} parent=1 // pred_check_branch
      %31 = sbr.rel (0) target = $region13
    $region12: #{tpu_custom_call.1} parent=1 // pred_region
      %s33 = ssub.s32 128, 128
      %34 = vsyncadd [#allocation5], %s33
      %s36 = sshll.u32 [#allocation6], 4
      %s37 = int_to_ptr.vmem [resolvable:$true] %s36
      %39 = dma.hbm_to_vmem [thread:$0]  %s2, 128, %s37, [#allocation5]
    $region13: #{tpu_custom_call.1} parent=1 // pred_fallthru
      _
    // Predicated region
    $region14: #{tpu_custom_call.1} parent=1 // pred_check
      _
    $region15: #{tpu_custom_call.1} parent=1 // pred_check_branch
      %41 = sbr.rel (0) target = $region17
    $region16: #{tpu_custom_call.1} parent=1 // pred_region
      %42 = dma.done [#allocation3], 128
    $region17: #{tpu_custom_call.1} parent=1 // pred_fallthru
      _
    // Predicated region
    $region18: #{tpu_custom_call.1} parent=1 // pred_check
      _
    $region19: #{tpu_custom_call.1} parent=1 // pred_check_branch
      %44 = sbr.rel (0) target = $region21
    $region20: #{tpu_custom_call.1} parent=1 // pred_region
      %45 = dma.done [#allocation5], 128
    $region21: #{tpu_custom_call.1} parent=1 // pred_fallthru
      _
    // Predicated region
    $region22: #{tpu_custom_call.1} parent=1 // pred_check
      _
    $region23: #{tpu_custom_call.1} parent=1 // pred_check_branch
      %47 = sbr.rel (0) target = $region25
    $region24: #{tpu_custom_call.1} parent=1 // pred_region
      %48 = dma.done [#allocation5], 128
    $region25: #{tpu_custom_call.1} parent=1 // pred_fallthru
      _
    %v49 = vld [vmem:[#allocation2] sm:$0xff]
    %v50 = vld [vmem:[#allocation4] sm:$0xff]
    %v51 = vadd.f32 %v49, %v50
    %v52 = vld [vmem:[#allocation6] sm:$0xff]
    %v53 = vsub.f32 %v51, %v52
    %v54 = vand.u32 2147483647, %v53
    %vm55 = vcmask 261120
    %v56 = vsel %vm55, %v54, 0.0
    %57 = vadd.xlane.f32.xlu0 %v56
    %v58 = vpop.xlane.xlu0 %57
    %v59 = vsub.f32 12.0, %v58
    %vm60 = vcmask 7168
    %61 = vst.msk [vmem:[%s3] sm:$0xff] %vm60, %v59
    // Predicated region
    $region26: #{tpu_custom_call.1} parent=1 // pred_check
      _
    $region27: #{tpu_custom_call.1} parent=1 // pred_check_branch
      %63 = sbr.rel (0) target = $region29
    $region28: #{tpu_custom_call.1} parent=1 // pred_region
      _
    $region29: #{tpu_custom_call.1} parent=1 // pred_fallthru
      _
    // Predicated region
    $region30: #{tpu_custom_call.1} parent=1 // pred_check
      _
    $region31: #{tpu_custom_call.1} parent=1 // pred_check_branch
      %65 = sbr.rel (0) target = $region33
    $region32: #{tpu_custom_call.1} parent=1 // pred_region
      _
    $region33: #{tpu_custom_call.1} parent=1 // pred_fallthru
      _
    %66 = vsyncpa [#allocation3], 1
    %67 = vsyncpa [#allocation5], 1

</llo_original>
